<compile_context>
chip_gen: v7x
topology: tpu7x:2x2x1
jax: 0.10.0
libtpu: 0.0.40
codegen_flags: <defaults>
</compile_context>

<pallas_src>
import functools

import jax
import jax.numpy as jnp
from jax.experimental import pallas as pl
from jax.experimental.pallas import tpu as pltpu


def _round_up(x: int, m: int) -> int:
    return ((x + m - 1) // m) * m


def _fused_linear_relu_kernel(x_ref, w_ref, b_ref, o_ref, *scratch,
                              nk: int, k_total: int, k_rem: int):
    """One (tm, tn) output tile of relu(x @ W^T + b).

    Grid = (M/tm, N/tn, K/tk) with the reduction (K) innermost. The f32
    accumulator lives in VMEM scratch (allocated only when nk > 1); the output
    is written exactly once, in its final dtype, on the last K step, fused with
    the final partial product, the bias add and the ReLU.
    """
    k = pl.program_id(2)

    x = x_ref[...]
    w = w_ref[...]
    if k_rem:
        # K % tk != 0: the last K block is ragged and its out-of-bounds columns
        # hold unspecified data. Zero the tail of BOTH operands in-register
        # (so garbage, incl. NaN, cannot leak into valid outputs) instead of
        # paying an HBM pad copy of x and W in the wrapper.
        tk = x_ref.shape[-1]
        col = jax.lax.broadcasted_iota(jnp.int32, (1, tk), 1) + k * tk
        valid = col < k_total
        x = jnp.where(valid, x, jnp.zeros((), x.dtype))
        w = jnp.where(valid, w, jnp.zeros((), w.dtype))

    # x:(tm,tk) contracted with W:(tn,tk) on the last dims == x @ W^T.
    # Keeping W in (N, K) layout avoids any HBM transpose of the weight.
    partial = jax.lax.dot_general(
        x, w,
        dimension_numbers=(((1,), (1,)), ((), ())),
        preferred_element_type=jnp.float32,
    )

    if nk == 1:
        o_ref[...] = jnp.maximum(
            partial + b_ref[...].astype(jnp.float32), 0.0
        ).astype(o_ref.dtype)
    else:
        acc_ref = scratch[0]

        @pl.when(k == 0)
        def _():
            acc_ref[...] = partial

        @pl.when(jnp.logical_and(k > 0, k < nk - 1))
        def _():
            acc_ref[...] += partial

        @pl.when(k == nk - 1)
        def _():
            # Fused epilogue: last partial + bias + ReLU in one pass, written
            # straight to the output tile in its final dtype (no extra RMW).
            o_ref[...] = jnp.maximum(
                acc_ref[...] + partial + b_ref[...].astype(jnp.float32), 0.0
            ).astype(o_ref.dtype)


@functools.partial(jax.jit, static_argnames=("tm", "tn", "tk", "compute_dtype"))
def fused_linear_relu(x, weight, bias=None, *, tm=None, tn=None, tk=None,
                      compute_dtype=jnp.bfloat16):
    """y = relu(x @ weight.T + bias), PyTorch nn.Linear semantics.

    x:      (..., K)   leading dims are flattened into the batch
    weight: (N, K)     out_features, in_features (PyTorch layout)
    bias:   (N,) or None
    """
    *lead, K = x.shape
    N, K2 = weight.shape
    assert K == K2, (K, K2)
    out_dtype = x.dtype
    x2 = x.reshape(-1, K)
    M = x2.shape[0]

    cd = jnp.dtype(compute_dtype)
    out_itemsize = jnp.dtype(out_dtype).itemsize
    m_align = 16 if cd.itemsize < 4 else 8

    # ---- generation-aware VMEM budget -------------------------------------
    try:
        vmem_phys = int(pltpu.get_tpu_info().vmem_capacity_bytes)
    except Exception:
        vmem_phys = 64 << 20                      # conservative (v7x per-TC)
    big_vmem = vmem_phys >= (96 << 20)            # v5e / v6e (128 MiB physical)
    vmem_cap = min((vmem_phys * 3) // 4, 100 << 20)   # ~96 MiB there, ~48 MiB v7x

    # ---- tile selection ----------------------------------------------------
    small_m = _round_up(M, m_align) <= 256        # weight-streaming regime
    tm_t = tm if tm is not None else 1024
    tn_t = tn if tn is not None else 2048
    tk_t = tk if tk is not None else (1024 if small_m else 512)

    def _pick(dim, target, align):
        # Whole-dim block (always a legal block shape) when the dim fits in a
        # single target tile; otherwise an aligned tile (ragged edges are ok).
        if dim <= target:
            return dim
        return _round_up(max(target, align), align)

    tm_ = _pick(M, tm_t, m_align)
    tn_ = _pick(N, tn_t, 128)
    tk_ = _pick(K, tk_t, 128)

    def _est(tm__, tn__, tk__):
        e = 2 * tm__ * tk__ * cd.itemsize          # x, double buffered
        e += 2 * tn__ * tk__ * cd.itemsize         # W, double buffered
        e += 2 * tm__ * tn__ * out_itemsize        # out, double buffered
        e += 2 * _round_up(tn__, 128) * 4          # bias
        if pl.cdiv(K, tk__) > 1:
            e += tm__ * tn__ * 4                   # f32 accumulator scratch
        return e

    budget = (vmem_cap * 7) // 10
    while _est(tm_, tn_, tk_) > budget:
        if tn_ >= tm_ and tn_ >= 512 and tn_ % 256 == 0:
            tn_ //= 2
        elif tm_ >= 512 and tm_ % 256 == 0:
            tm_ //= 2
        elif tn_ >= 512 and tn_ % 256 == 0:
            tn_ //= 2
        elif tk_ >= 512 and tk_ % 256 == 0:
            tk_ //= 2
        else:
            break

    if not big_vmem:
        # v7x: 2 TensorCores per chip. Keep >= 2 blocks on the ("parallel",
        # "parallel") grid axes so both cores get work.
        if pl.cdiv(M, tm_) * pl.cdiv(N, tn_) == 1:
            if N >= 512 and tn_ % 256 == 0:
                tn_ //= 2
            elif M >= 512 and tm_ % 256 == 0:
                tm_ //= 2

    grid = (pl.cdiv(M, tm_), pl.cdiv(N, tn_), pl.cdiv(K, tk_))
    nk = grid[2]
    k_rem = K % tk_

    # ---- operands (casts skipped when already in the compute dtype) --------
    # TODO(synk): for repeated inference calls, store the weight pre-cast to
    # the compute dtype so this cast never runs.
    xc = x2 if x2.dtype == cd else x2.astype(cd)
    wc = weight if weight.dtype == cd else weight.astype(cd)
    if bias is None:
        bc = jnp.zeros((1, N), jnp.float32)
    else:
        bc = bias.astype(jnp.float32).reshape(1, N)

    est = _est(tm_, tn_, tk_)
    vmem_limit = int(min(max(est * 14 // 10 + (2 << 20), 16 << 20), vmem_cap))

    kernel = functools.partial(_fused_linear_relu_kernel,
                               nk=nk, k_total=K, k_rem=k_rem)

    y = pl.pallas_call(
        kernel,
        out_shape=jax.ShapeDtypeStruct((M, N), out_dtype),
        grid_spec=pltpu.PrefetchScalarGridSpec(
            num_scalar_prefetch=0,
            grid=grid,
            in_specs=[
                pl.BlockSpec((tm_, tk_), lambda i, j, k: (i, k)),   # x tile
                pl.BlockSpec((tn_, tk_), lambda i, j, k: (j, k)),   # W tile (N, K)
                pl.BlockSpec((1, tn_), lambda i, j, k: (0, j)),     # bias tile
            ],
            out_specs=pl.BlockSpec((tm_, tn_), lambda i, j, k: (i, j)),
            scratch_shapes=(
                [pltpu.VMEM((tm_, tn_), jnp.float32)] if nk > 1 else []
            ),
        ),
        compiler_params=pltpu.CompilerParams(
            dimension_semantics=("parallel", "parallel", "arbitrary"),
            vmem_limit_bytes=vmem_limit,
        ),
    )(xc, wc, bc)

    return y.reshape(*lead, N)


if __name__ == "__main__":
    key = jax.random.PRNGKey(0)
    k_x, k_w, k_b = jax.random.split(key, 3)

    batch, in_features, out_features = 8, 32, 64

    x = jax.random.normal(k_x, (batch, in_features), dtype=jnp.float32)
    weight = jax.random.normal(k_w, (out_features, in_features),
                               dtype=jnp.float32) * 0.1
    bias = jax.random.normal(k_b, (out_features,), dtype=jnp.float32) * 0.1

    y = jax.block_until_ready(fused_linear_relu(x, weight, bias))

    def ref(x_, w_, b_):
        # Same bf16 operand quantization + f32 accumulation as the kernel.
        return jnp.maximum(
            jax.lax.dot_general(
                x_.astype(jnp.bfloat16), w_.astype(jnp.bfloat16),
                dimension_numbers=(((1,), (1,)), ((), ())),
                preferred_element_type=jnp.float32,
            ) + b_, 0.0)

    y_ref = ref(x, weight, bias)
    assert y.shape == (batch, out_features)
    assert y.dtype == x.dtype
    assert jnp.allclose(y, y_ref, atol=1e-2, rtol=1e-2), "mismatch vs reference"

    # Also exercise the tiled paths: multi-step K reduction with a ragged last
    # K block plus ragged M and N edge blocks, still at a small size.
    k2x, k2w, k2b = jax.random.split(jax.random.PRNGKey(1), 3)
    M2, K2, N2 = 24, 160, 192
    x2 = jax.random.normal(k2x, (M2, K2), dtype=jnp.float32)
    w2 = jax.random.normal(k2w, (N2, K2), dtype=jnp.float32) * 0.05
    b2 = jax.random.normal(k2b, (N2,), dtype=jnp.float32) * 0.1
    y2 = jax.block_until_ready(
        fused_linear_relu(x2, w2, b2, tm=16, tn=128, tk=128))
    y2_ref = ref(x2, w2, b2)
    assert y2.shape == (M2, N2)
    assert jnp.allclose(y2, y2_ref, atol=5e-2, rtol=5e-2), "tiled-path mismatch"

    print("KERNEL_OK")
</pallas_src>

<mosaic_0001>
module attributes {stable_mosaic.version = 11 : i64} {
  func.func @_fused_linear_relu_kernel(%arg0: i32, %arg1: i32, %arg2: i32, %arg3: memref<8x32xbf16, #tpu.memory_space<vmem>>, %arg4: memref<64x32xbf16, #tpu.memory_space<vmem>>, %arg5: memref<1x64xf32, #tpu.memory_space<vmem>>, %arg6: memref<8x64xf32, #tpu.memory_space<vmem>>) attributes {dimension_semantics = [#tpu.dimension_semantics<parallel>, #tpu.dimension_semantics<parallel>, #tpu.dimension_semantics<arbitrary>], iteration_bounds = array<i64: 1, 1, 1>, scalar_prefetch = 0 : i64, scratch_operands = 0 : i64, tpu.core_type = #tpu.core_type<tc>, window_params = [{transform_indices = @transform_0, window_bounds = array<i64: 8, 32>}, {transform_indices = @transform_1, window_bounds = array<i64: 64, 32>}, {transform_indices = @transform_2, window_bounds = array<i64: 1, 64>}, {transform_indices = @transform_3, window_bounds = array<i64: 8, 64>}]} {
    %c0 = arith.constant 0 : index
    %c0_0 = arith.constant 0 : index
    %0 = vector.load %arg3[%c0, %c0_0] : memref<8x32xbf16, #tpu.memory_space<vmem>>, vector<8x32xbf16>
    %c0_1 = arith.constant 0 : index
    %c0_2 = arith.constant 0 : index
    %1 = vector.load %arg4[%c0_1, %c0_2] : memref<64x32xbf16, #tpu.memory_space<vmem>>, vector<64x32xbf16>
    %cst = arith.constant dense<0.000000e+00> : vector<8x64xf32>
    %2 = tpu.matmul %0, %1, %cst {dimension_numbers = #tpu.dot_dimension_numbers<[1], [1], [0], [0], [0, 0, 1, 0], [], []>} : vector<8x32xbf16>, vector<64x32xbf16>, vector<8x64xf32> -> vector<8x64xf32>
    %c0_3 = arith.constant 0 : index
    %c0_4 = arith.constant 0 : index
    %3 = vector.load %arg5[%c0_3, %c0_4] : memref<1x64xf32, #tpu.memory_space<vmem>>, vector<1x64xf32>
    %4 = vector.broadcast %3 : vector<1x64xf32> to vector<8x64xf32>
    %5 = arith.addf %2, %4 : vector<8x64xf32>
    %cst_5 = arith.constant 0.000000e+00 : f32
    %6 = vector.broadcast %cst_5 : f32 to vector<8x64xf32>
    %7 = arith.maximumf %5, %6 : vector<8x64xf32>
    %c0_6 = arith.constant 0 : index
    %c0_7 = arith.constant 0 : index
    %8 = vector.load %arg6[%c0_6, %c0_7] : memref<8x64xf32, #tpu.memory_space<vmem>>, vector<8x64xf32>
    tpu.vector_store %arg6[%c0_6, %c0_7], %7 {strides = array<i32>} : memref<8x64xf32, #tpu.memory_space<vmem>>, vector<8x64xf32>,
    return
  }
  func.func @transform_0(%arg0: i32, %arg1: i32, %arg2: i32) -> (i32, i32) {
    %c0_i32 = arith.constant 0 : i32
    return %arg0, %arg2 : i32, i32
  }
  func.func @transform_1(%arg0: i32, %arg1: i32, %arg2: i32) -> (i32, i32) {
    %c0_i32 = arith.constant 0 : i32
    return %arg1, %arg2 : i32, i32
  }
  func.func @transform_2(%arg0: i32, %arg1: i32, %arg2: i32) -> (i32, i32) {
    %c0_i32 = arith.constant 0 : i32
    %c0_i32_0 = arith.constant 0 : i32
    return %c0_i32, %arg1 : i32, i32
  }
  func.func @transform_3(%arg0: i32, %arg1: i32, %arg2: i32) -> (i32, i32) {
    %c0_i32 = arith.constant 0 : i32
    return %arg0, %arg1 : i32, i32
  }
}

</mosaic_0001>

<llo_original>
// kernel: fused_linear_relu.1
$region0: #{fused_linear_relu.1}
  #allocation0 [shape = 'u32[]', space=smem, size = 0x4, offset = 0x4, fixed_abs, tag = 'smem constant byte address 0x4 - core index']
  #allocation1 [shape = 'u32[144,128]{1,0:T(1,128)}', space=vmem, size = 0x12000, scoped, tag = 'internal scratch']
  %s0 = inlined_call_operand.vmem [shape: bf16[8,32], index: 0, kind: input, shape index: {}]
  %s1 = inlined_call_operand.vmem [shape: bf16[64,32], index: 1, kind: input, shape index: {}]
  %s2 = inlined_call_operand.vmem [shape: f32[1,64], index: 2, kind: input, shape index: {}]
  %s3 = inlined_call_operand.hbm [shape: f32[8,64], index: 3, kind: output, shape index: {}]
  %s4 = sld [smem:[#allocation0]]
  $region22: #{fused_linear_relu.1} parent=0
    _
  %s6 = ssub.s32 1, %s4
  %s7 = scalar_select 0, %s6, %s4
  $region1: #{fused_linear_relu.1} parent=0
    #allocation2 [shape = 'u8[4096]{0}', space=vmem, size = 0x1000, scoped, tag = 'output window, operand 0, single buffered']
    #allocation3 [shape = 's32[1]{0}', space=sflag, size = 0x4, scoped, tag = 'scoped memory for fused_linear_relu.1']
    %8 = vsyncpa [#allocation3], 0
    // Predicated region
    $region2: #{fused_linear_relu.1} parent=1 // pred_check
      _
    $region3: #{fused_linear_relu.1} parent=1 // pred_check_branch
      %10 = sbr.rel (0) target = $region5
    $region4: #{fused_linear_relu.1} parent=1 // pred_region
      _
    $region5: #{fused_linear_relu.1} parent=1 // pred_fallthru
      _
    // Predicated region
    $region6: #{fused_linear_relu.1} parent=1 // pred_check
      _
    $region7: #{fused_linear_relu.1} parent=1 // pred_check_branch
      %12 = sbr.rel (0) target = $region9
    $region8: #{fused_linear_relu.1} parent=1 // pred_region
      _
    $region9: #{fused_linear_relu.1} parent=1 // pred_fallthru
      _
    // Predicated region
    $region10: #{fused_linear_relu.1} parent=1 // pred_check
      _
    $region11: #{fused_linear_relu.1} parent=1 // pred_check_branch
      %14 = sbr.rel (0) target = $region13
    $region12: #{fused_linear_relu.1} parent=1 // pred_region
      _
    $region13: #{fused_linear_relu.1} parent=1 // pred_fallthru
      _
    %v16 = vld [vmem:[%s0] sm:$0xf]
    %v17 = vld [vmem:[%s1] sm:$0xf]
    %v18 = vld [vmem:[%s1 + $0x4] sm:$0xf]
    %v19 = vld [vmem:[%s1 + $0x8] sm:$0xf]
    %v20 = vld [vmem:[%s1 + $0xc] sm:$0xf]
    %v21 = vld [vmem:[%s1 + $0x10] sm:$0xf]
    %v22 = vld [vmem:[%s1 + $0x14] sm:$0xf]
    %v23 = vld [vmem:[%s1 + $0x18] sm:$0xf]
    %v24 = vld [vmem:[%s1 + $0x1c] sm:$0xf]
    %v25 = vld [vmem:[%s2] sm:$0x1]
    %v27 = vlaneseq
    %v28 = vshrl.u32 %v27, 7
    %v29 = vsub.s32 0, %v28
    %v30 = vrot.slane %v25, %v29
    %v40 = vunpack.c.l.b16 %v17
    %v41 = vunpack.c.l.b16 %v18
    %v42 = vunpack.c.l.b16 %v19
    %v43 = vunpack.c.l.b16 %v20
    %v44 = vunpack.c.l.b16 %v21
    %v45 = vunpack.c.l.b16 %v22
    %v46 = vunpack.c.l.b16 %v23
    %v47 = vunpack.c.l.b16 %v24
    %v48 = vpack.c.b16 %v41, %v40
    %v49 = vpack.c.b16 %v43, %v42
    %v50 = vpack.c.b16 %v45, %v44
    %v51 = vpack.c.b16 %v47, %v46
    %vm52 = vcmask 261120
    %v54 = vsel %vm52, %v16, 0
    %v57 = vsel %vm52, %v48, 0
    %v60 = vsel %vm52, %v49, 0
    %v63 = vsel %vm52, %v50, 0
    %v66 = vsel %vm52, %v51, 0
    %68 = vmatprep.subr.bf16.mxu0 0
    %69 = vmatpush1.bf16.xpose.msra.mxu0 %v57
    %70 = vmatprep.subr.bf16.mxu0 0
    %71 = vmatpush1.bf16.xpose.msra.mxu0 %v60
    %72 = vmatprep.subr.bf16.mxu0 0
    %73 = vmatpush1.bf16.xpose.msra.mxu0 %v63
    %74 = vmatprep.subr.bf16.mxu0 0
    %75 = vmatpush1.bf16.xpose.msra.mxu0 %v66
    %76 = vmatprep.subr.bf16.mxu0 0
    %77 = vmatpush1.bf16.xpose.msra.mxu0 0
    %78 = vmatprep.subr.bf16.mxu0 0
    %79 = vmatpush1.bf16.xpose.msra.mxu0 0
    %80 = vmatprep.subr.bf16.mxu0 0
    %81 = vmatpush1.bf16.xpose.msra.mxu0 0
    %82 = vmatprep.subr.bf16.mxu0 0
    %83 = vmatpush1.bf16.xpose.msra.mxu0 0
    %84 = vmatprep.subr.bf16.mxu0 0
    %85 = vmatpush1.bf16.xpose.msra.mxu0 0
    %86 = vmatprep.subr.bf16.mxu0 0
    %87 = vmatpush1.bf16.xpose.msra.mxu0 0
    %88 = vmatprep.subr.bf16.mxu0 0
    %89 = vmatpush1.bf16.xpose.msra.mxu0 0
    %90 = vmatprep.subr.bf16.mxu0 0
    %91 = vmatpush1.bf16.xpose.msra.mxu0 0
    %92 = vmatprep.subr.bf16.mxu0 0
    %93 = vmatpush1.bf16.xpose.msra.mxu0 0
    %94 = vmatprep.subr.bf16.mxu0 0
    %95 = vmatpush1.bf16.xpose.msra.mxu0 0
    %96 = vmatprep.subr.bf16.mxu0 0
    %97 = vmatpush1.bf16.xpose.msra.mxu0 0
    %98 = vmatprep.subr.bf16.mxu0 0
    %99 = vmatpush1.bf16.xpose.msra.mxu0 0
    %100 = vmatprep.mubr.bf16.mxu0 0
    %101 = vmatmul.mubr.bf16.gmra.mrb[0].mxu0 %v54
    %v102 = vpop.f32.mrb[0].mxu0
    %v103 = vadd.f32 %v30, %v102
    %v104 = vpop.f32.mrb[0].mxu0
    %v105 = vpop.f32.mrb[0].mxu0
    %v106 = vpop.f32.mrb[0].mxu0
    %107 = vdwg.mxu0
    %v108 = vmax.f32 %v103, 0.0
    %vm109 = vcmask 523264
    %110 = vst.msk [vmem:[#allocation2] sm:$0xff] %vm109, %v108
    // Predicated region
    $region14: #{fused_linear_relu.1} parent=1 // pred_check
      _
    $region15: #{fused_linear_relu.1} parent=1 // pred_check_branch
      %112 = sbr.rel (0) target = $region17
    $region16: #{fused_linear_relu.1} parent=1 // pred_region
      %s114 = ssub.s32 128, 128
      %115 = vsyncadd [#allocation3], %s114
      %s117 = sshll.u32 [#allocation2], 4
      %s118 = int_to_ptr.vmem [resolvable:$true] %s117
      %120 = dma.vmem_to_hbm [thread:$0]  %s118, 128, %s3, [#allocation3]
    $region17: #{fused_linear_relu.1} parent=1 // pred_fallthru
      _
    // Predicated region
    $region18: #{fused_linear_relu.1} parent=1 // pred_check
      _
    $region19: #{fused_linear_relu.1} parent=1 // pred_check_branch
      %122 = sbr.rel (0) target = $region21
    $region20: #{fused_linear_relu.1} parent=1 // pred_region
      %123 = dma.done [#allocation3], 128
    $region21: #{fused_linear_relu.1} parent=1 // pred_fallthru
      _
    %124 = vsyncpa [#allocation3], 1

</llo_original>
